<compile_context>
chip_gen: v5e
topology: v5e:2x2
jax: 0.10.0
libtpu: 0.0.40
codegen_flags: <defaults>
</compile_context>

<pallas_src>
import functools
import math

import jax
import jax.numpy as jnp
from jax import lax
from jax.experimental import pallas as pl
from jax.experimental.pallas import tpu as pltpu


def _cdiv(a, b):
    return (a + b - 1) // b


def _round_up(a, b):
    return _cdiv(a, b) * b


def _mlp_var_kernel(x_ref, w1_ref, b1_ref, w2_ref, b2_ref,
                    wh_ref, bh_ref, out_ref, *, out_dim, two_out):
    """One batch tile of the lane-packed MLP:
       relu(relu(x@W1+b1)@W2+b2)@Wh+bh, exp() applied only to variance lanes."""
    wdt = w1_ref.dtype          # f32, or bf16 when the opt-in cast is enabled
    x = x_ref[...]
    h1 = jnp.dot(x, w1_ref[...], preferred_element_type=jnp.float32) + b1_ref[...]
    h1 = jnp.maximum(h1, 0.0)
    h2 = jnp.dot(h1.astype(wdt), w2_ref[...],
                 preferred_element_type=jnp.float32) + b2_ref[...]
    h2 = jnp.maximum(h2, 0.0)
    head = jnp.dot(h2.astype(wdt), wh_ref[...],
                   preferred_element_type=jnp.float32) + bh_ref[...]
    # Lane layout after packing: repeated groups of `two_out` columns.
    # Columns [0, out_dim) of each group = mean (fc3), rest = log-var (fc4).
    col = lax.broadcasted_iota(jnp.int32, head.shape, dimension=1)
    is_mean = (col % two_out) < out_dim
    # Zero the mean lanes before exp so unselected lanes can't overflow to inf.
    out_ref[...] = jnp.where(is_mean, head, jnp.exp(jnp.where(is_mean, 0.0, head)))


def prepare_params(params, inp_dim, *, use_bf16_matmul=False):
    """One-time parameter prep (hoisted out of the per-call path):
       * fuse fc3/fc4 into a single head weight/bias,
       * lane-pack PACK logical rows per 128-lane vreg via block-diagonal
         kron(I_PACK, W) weights and PACK-tiled biases."""
    w1, b1, w2, b2, w3, b3, w4, b4 = params
    H = w1.shape[1]
    out_dim = w3.shape[1]
    pack = max(1, 128 // max(inp_dim, H))   # 4 when inp_dim = H = 32
    mm_dtype = jnp.bfloat16 if use_bf16_matmul else jnp.float32

    w_head = jnp.concatenate([w3, w4], axis=1)   # (H, 2*out_dim)
    b_head = jnp.concatenate([b3, b4], axis=1)   # (1, 2*out_dim)

    eye = jnp.eye(pack, dtype=jnp.float32)
    return dict(
        pack=pack, inp_dim=inp_dim, hidden=H, out_dim=out_dim,
        w1=jnp.kron(eye, w1).astype(mm_dtype),             # (P*inp, P*H)
        b1=jnp.tile(b1, (1, pack)).astype(jnp.float32),    # (1, P*H)
        w2=jnp.kron(eye, w2).astype(mm_dtype),             # (P*H, P*H)
        b2=jnp.tile(b2, (1, pack)).astype(jnp.float32),    # (1, P*H)
        wh=jnp.kron(eye, w_head).astype(mm_dtype),         # (P*H, P*2*out)
        bh=jnp.tile(b_head, (1, pack)).astype(jnp.float32) # (1, P*2*out)
    )


def linear_net_var_forward(x, prep, *, max_rows_per_tile=16384):
    """Pallas forward for LinearNetVar. Returns (mean, var), each .squeeze()'d
    like the PyTorch module."""
    inp_dim, pack = prep["inp_dim"], prep["pack"]
    H, out_dim = prep["hidden"], prep["out_dim"]
    two_out = 2 * out_dim
    Dp, Hp, Op = pack * inp_dim, pack * H, pack * two_out

    x2d = x.reshape(-1, inp_dim)
    B = x2d.shape[0]

    # --- batch-tile geometry: few, large grid steps -------------------------
    # Per-grid-step pipeline overhead is ~0.35us, so tiles are made as large as
    # reasonable.  A 16K-logical-row (4K packed) x tile is only ~2 MiB f32,
    # ~4 MiB double-buffered, far under default scoped VMEM on v5e/v6e/v7x,
    # so no vmem_limit_bytes override is needed at these hidden sizes.
    B_pack = _cdiv(B, pack)
    max_tile = max(8, max_rows_per_tile // pack)            # packed rows / tile
    num_steps = max(1, _cdiv(B_pack, max_tile))
    if num_steps > 1 and num_steps % 2:
        num_steps += 1       # even grid so v7x can split tiles across both TCs
    TB = _round_up(_cdiv(B_pack, num_steps), 8)             # (8,128)-legal tile
    B_pack_pad = TB * num_steps
    B_pad = B_pack_pad * pack

    if B_pad != B:
        x2d = jnp.pad(x2d, ((0, B_pad - B), (0, 0)))
    xp = x2d.reshape(B_pack_pad, Dp).astype(prep["w1"].dtype)

    flops = 2 * B_pack_pad * (Dp * Hp + Hp * Hp + Hp * Op)
    bytes_accessed = 4 * (xp.size + prep["w1"].size + prep["b1"].size
                          + prep["w2"].size + prep["b2"].size
                          + prep["wh"].size + prep["bh"].size
                          + B_pack_pad * Op)

    kernel = functools.partial(_mlp_var_kernel, out_dim=out_dim, two_out=two_out)
    out = pl.pallas_call(
        kernel,
        out_shape=jax.ShapeDtypeStruct((B_pack_pad, Op), jnp.float32),
        grid_spec=pltpu.PrefetchScalarGridSpec(
            num_scalar_prefetch=0,
            grid=(num_steps,),
            in_specs=[
                pl.BlockSpec((TB, Dp), lambda i: (i, 0)),   # x: tiled over batch
                pl.BlockSpec((Dp, Hp), lambda i: (0, 0)),   # weights/biases stay
                pl.BlockSpec((1, Hp), lambda i: (0, 0)),    # VMEM-resident across
                pl.BlockSpec((Hp, Hp), lambda i: (0, 0)),   # all grid steps
                pl.BlockSpec((1, Hp), lambda i: (0, 0)),
                pl.BlockSpec((Hp, Op), lambda i: (0, 0)),
                pl.BlockSpec((1, Op), lambda i: (0, 0)),
            ],
            out_specs=pl.BlockSpec((TB, Op), lambda i: (i, 0)),
        ),
        compiler_params=pltpu.CompilerParams(
            # Batch tiles are independent; v7x can shard them across its 2 TCs.
            dimension_semantics=("parallel",),
        ),
        cost_estimate=pl.CostEstimate(
            flops=flops,
            transcendentals=B_pack_pad * Op,
            bytes_accessed=bytes_accessed,
        ),
    )(xp, prep["w1"], prep["b1"], prep["w2"], prep["b2"], prep["wh"], prep["bh"])

    # Unpack the 4-row lane packing back to logical rows, then split heads.
    out = out.reshape(B_pad, two_out)[:B]
    mean = jnp.squeeze(out[:, :out_dim])   # PyTorch .squeeze(): drop size-1 dims
    var = jnp.squeeze(out[:, out_dim:])
    return mean, var


def init_linear_params(key, in_features, out_features):
    """PyTorch nn.Linear default init: U(-1/sqrt(fan_in), 1/sqrt(fan_in))."""
    kw, kb = jax.random.split(key)
    bound = 1.0 / math.sqrt(in_features)
    # stored as (in, out) for the kernel's x @ W convention
    w = jax.random.uniform(kw, (in_features, out_features), jnp.float32,
                           minval=-bound, maxval=bound)
    b = jax.random.uniform(kb, (1, out_features), jnp.float32,
                           minval=-bound, maxval=bound)
    return w, b


if __name__ == "__main__":
    inp_dim, num_hidden, out_dim = 32, 32, 1

    key = jax.random.PRNGKey(0)
    k_x, k1, k2, k3, k4 = jax.random.split(key, 5)

    w1, b1 = init_linear_params(k1, inp_dim, num_hidden)
    w2, b2 = init_linear_params(k2, num_hidden, num_hidden)
    w3, b3 = init_linear_params(k3, num_hidden, out_dim)
    w4, b4 = init_linear_params(k4, num_hidden, out_dim)
    params = (w1, b1, w2, b2, w3, b3, w4, b4)

    # One-time parameter prep (head fusion + block-diagonal lane packing).
    # use_bf16_matmul=True is the large-batch opt-in (re-validate tolerance).
    prep = prepare_params(params, inp_dim, use_bf16_matmul=False)

    # input that exercises the x.view(-1, inp_dim) flattening
    x = jax.random.normal(k_x, (2, 4, inp_dim), dtype=jnp.float32)

    mean, var = linear_net_var_forward(x, prep)
    jax.block_until_ready((mean, var))

    # pure-JAX reference check
    x2d = x.reshape(-1, inp_dim)
    h1 = jnp.maximum(x2d @ w1 + b1, 0.0)
    h2 = jnp.maximum(h1 @ w2 + b2, 0.0)
    mean_ref = jnp.squeeze(h2 @ w3 + b3)
    var_ref = jnp.squeeze(jnp.exp(h2 @ w4 + b4))
    assert mean.shape == mean_ref.shape and var.shape == var_ref.shape
    assert jnp.allclose(mean, mean_ref, atol=1e-5)
    assert jnp.allclose(var, var_ref, atol=1e-5)

    print("KERNEL_OK")
</pallas_src>

<mosaic_0001>
module attributes {stable_mosaic.version = 11 : i64} {
  func.func @_mlp_var_kernel(%arg0: i32, %arg1: memref<8x128xf32, #tpu.memory_space<vmem>>, %arg2: memref<128x128xf32, #tpu.memory_space<vmem>>, %arg3: memref<1x128xf32, #tpu.memory_space<vmem>>, %arg4: memref<128x128xf32, #tpu.memory_space<vmem>>, %arg5: memref<1x128xf32, #tpu.memory_space<vmem>>, %arg6: memref<128x8xf32, #tpu.memory_space<vmem>>, %arg7: memref<1x8xf32, #tpu.memory_space<vmem>>, %arg8: memref<8x8xf32, #tpu.memory_space<vmem>>) attributes {dimension_semantics = [#tpu.dimension_semantics<parallel>], iteration_bounds = array<i64: 1>, scalar_prefetch = 0 : i64, scratch_operands = 0 : i64, tpu.core_type = #tpu.core_type<tc>, window_params = [{transform_indices = @transform_0, window_bounds = array<i64: 8, 128>}, {pipeline_mode = #tpu.pipeline_mode<synchronous>, transform_indices = @transform_1, window_bounds = array<i64: 128, 128>}, {pipeline_mode = #tpu.pipeline_mode<synchronous>, transform_indices = @transform_2, window_bounds = array<i64: 1, 128>}, {pipeline_mode = #tpu.pipeline_mode<synchronous>, transform_indices = @transform_3, window_bounds = array<i64: 128, 128>}, {pipeline_mode = #tpu.pipeline_mode<synchronous>, transform_indices = @transform_4, window_bounds = array<i64: 1, 128>}, {pipeline_mode = #tpu.pipeline_mode<synchronous>, transform_indices = @transform_5, window_bounds = array<i64: 128, 8>}, {pipeline_mode = #tpu.pipeline_mode<synchronous>, transform_indices = @transform_6, window_bounds = array<i64: 1, 8>}, {transform_indices = @transform_7, window_bounds = array<i64: 8, 8>}]} {
    %c0 = arith.constant 0 : index
    %c0_0 = arith.constant 0 : index
    %0 = vector.load %arg1[%c0, %c0_0] : memref<8x128xf32, #tpu.memory_space<vmem>>, vector<8x128xf32>
    %c0_1 = arith.constant 0 : index
    %c0_2 = arith.constant 0 : index
    %1 = vector.load %arg2[%c0_1, %c0_2] : memref<128x128xf32, #tpu.memory_space<vmem>>, vector<128x128xf32>
    %cst = arith.constant dense<0.000000e+00> : vector<8x128xf32>
    %2 = tpu.matmul %0, %1, %cst {dimension_numbers = #tpu.dot_dimension_numbers<[1], [0], [0], [1], [0, 0, 1, 1], [], []>} : vector<8x128xf32>, vector<128x128xf32>, vector<8x128xf32> -> vector<8x128xf32>
    %c0_3 = arith.constant 0 : index
    %c0_4 = arith.constant 0 : index
    %3 = vector.load %arg3[%c0_3, %c0_4] : memref<1x128xf32, #tpu.memory_space<vmem>>, vector<1x128xf32>
    %4 = vector.broadcast %3 : vector<1x128xf32> to vector<8x128xf32>
    %5 = arith.addf %2, %4 : vector<8x128xf32>
    %cst_5 = arith.constant 0.000000e+00 : f32
    %6 = vector.broadcast %cst_5 : f32 to vector<8x128xf32>
    %7 = arith.maximumf %5, %6 : vector<8x128xf32>
    %c0_6 = arith.constant 0 : index
    %c0_7 = arith.constant 0 : index
    %8 = vector.load %arg4[%c0_6, %c0_7] : memref<128x128xf32, #tpu.memory_space<vmem>>, vector<128x128xf32>
    %cst_8 = arith.constant dense<0.000000e+00> : vector<8x128xf32>
    %9 = tpu.matmul %7, %8, %cst_8 {dimension_numbers = #tpu.dot_dimension_numbers<[1], [0], [0], [1], [0, 0, 1, 1], [], []>} : vector<8x128xf32>, vector<128x128xf32>, vector<8x128xf32> -> vector<8x128xf32>
    %c0_9 = arith.constant 0 : index
    %c0_10 = arith.constant 0 : index
    %10 = vector.load %arg5[%c0_9, %c0_10] : memref<1x128xf32, #tpu.memory_space<vmem>>, vector<1x128xf32>
    %11 = vector.broadcast %10 : vector<1x128xf32> to vector<8x128xf32>
    %12 = arith.addf %9, %11 : vector<8x128xf32>
    %cst_11 = arith.constant 0.000000e+00 : f32
    %13 = vector.broadcast %cst_11 : f32 to vector<8x128xf32>
    %14 = arith.maximumf %12, %13 : vector<8x128xf32>
    %c0_12 = arith.constant 0 : index
    %c0_13 = arith.constant 0 : index
    %15 = vector.load %arg6[%c0_12, %c0_13] : memref<128x8xf32, #tpu.memory_space<vmem>>, vector<128x8xf32>
    %cst_14 = arith.constant dense<0.000000e+00> : vector<8x8xf32>
    %16 = tpu.matmul %14, %15, %cst_14 {dimension_numbers = #tpu.dot_dimension_numbers<[1], [0], [0], [1], [0, 0, 1, 1], [], []>} : vector<8x128xf32>, vector<128x8xf32>, vector<8x8xf32> -> vector<8x8xf32>
    %c0_15 = arith.constant 0 : index
    %c0_16 = arith.constant 0 : index
    %17 = vector.load %arg7[%c0_15, %c0_16] : memref<1x8xf32, #tpu.memory_space<vmem>>, vector<1x8xf32>
    %18 = vector.broadcast %17 : vector<1x8xf32> to vector<8x8xf32>
    %19 = arith.addf %16, %18 : vector<8x8xf32>
    %20 = tpu.iota {dimensions = array<i32: 1>} : vector<8x8xi32>
    %c2_i32 = arith.constant 2 : i32
    %c0_i32 = arith.constant 0 : i32
    %21 = arith.cmpi eq, %c2_i32, %c0_i32 : i32
    %c1_i32 = arith.constant 1 : i32
    %22 = arith.select %21, %c1_i32, %c2_i32 : i32
    %23 = vector.broadcast %22 : i32 to vector<8x8xi32>
    %24 = arith.remsi %20, %23 : vector<8x8xi32>
    %c0_i32_17 = arith.constant 0 : i32
    %25 = vector.broadcast %c0_i32_17 : i32 to vector<8x8xi32>
    %26 = arith.cmpi ne, %24, %25 : vector<8x8xi32>
    %c0_i32_18 = arith.constant 0 : i32
    %27 = vector.broadcast %c0_i32_18 : i32 to vector<8x8xi32>
    %28 = arith.cmpi slt, %24, %27 : vector<8x8xi32>
    %c0_i32_19 = arith.constant 0 : i32
    %29 = arith.cmpi slt, %22, %c0_i32_19 : i32
    %30 = vector.broadcast %29 : i1 to vector<8x8xi1>
    %31 = vector.broadcast %30 : vector<8x8xi1> to vector<8x8xi1>
    %32 = arith.xori %28, %31 : vector<8x8xi1>
    %33 = arith.andi %32, %26 : vector<8x8xi1>
    %34 = vector.broadcast %22 : i32 to vector<8x8xi32>
    %35 = arith.addi %24, %34 : vector<8x8xi32>
    %36 = arith.select %33, %35, %24 : vector<8x8xi1>, vector<8x8xi32>
    %c1_i32_20 = arith.constant 1 : i32
    %37 = vector.broadcast %c1_i32_20 : i32 to vector<8x8xi32>
    %38 = arith.cmpi slt, %36, %37 : vector<8x8xi32>
    %cst_21 = arith.constant 0.000000e+00 : f32
    %39 = vector.broadcast %cst_21 : f32 to vector<8x8xf32>
    %40 = arith.select %38, %39, %19 : vector<8x8xi1>, vector<8x8xf32>
    %41 = math.exp %40 : vector<8x8xf32>
    %42 = arith.select %38, %19, %41 : vector<8x8xi1>, vector<8x8xf32>
    %c0_22 = arith.constant 0 : index
    %c0_23 = arith.constant 0 : index
    %43 = vector.load %arg8[%c0_22, %c0_23] : memref<8x8xf32, #tpu.memory_space<vmem>>, vector<8x8xf32>
    tpu.vector_store %arg8[%c0_22, %c0_23], %42 {strides = array<i32>} : memref<8x8xf32, #tpu.memory_space<vmem>>, vector<8x8xf32>,
    return
  }
  func.func @transform_0(%arg0: i32) -> (i32, i32) {
    %c0_i32 = arith.constant 0 : i32
    %c0_i32_0 = arith.constant 0 : i32
    return %arg0, %c0_i32 : i32, i32
  }
  func.func @transform_1(%arg0: i32) -> (i32, i32) {
    %c0_i32 = arith.constant 0 : i32
    %c0_i32_0 = arith.constant 0 : i32
    %c0_i32_1 = arith.constant 0 : i32
    return %c0_i32, %c0_i32_0 : i32, i32
  }
  func.func @transform_2(%arg0: i32) -> (i32, i32) {
    %c0_i32 = arith.constant 0 : i32
    %c0_i32_0 = arith.constant 0 : i32
    %c0_i32_1 = arith.constant 0 : i32
    return %c0_i32, %c0_i32_0 : i32, i32
  }
  func.func @transform_3(%arg0: i32) -> (i32, i32) {
    %c0_i32 = arith.constant 0 : i32
    %c0_i32_0 = arith.constant 0 : i32
    %c0_i32_1 = arith.constant 0 : i32
    return %c0_i32, %c0_i32_0 : i32, i32
  }
  func.func @transform_4(%arg0: i32) -> (i32, i32) {
    %c0_i32 = arith.constant 0 : i32
    %c0_i32_0 = arith.constant 0 : i32
    %c0_i32_1 = arith.constant 0 : i32
    return %c0_i32, %c0_i32_0 : i32, i32
  }
  func.func @transform_5(%arg0: i32) -> (i32, i32) {
    %c0_i32 = arith.constant 0 : i32
    %c0_i32_0 = arith.constant 0 : i32
    %c0_i32_1 = arith.constant 0 : i32
    return %c0_i32, %c0_i32_0 : i32, i32
  }
  func.func @transform_6(%arg0: i32) -> (i32, i32) {
    %c0_i32 = arith.constant 0 : i32
    %c0_i32_0 = arith.constant 0 : i32
    %c0_i32_1 = arith.constant 0 : i32
    return %c0_i32, %c0_i32_0 : i32, i32
  }
  func.func @transform_7(%arg0: i32) -> (i32, i32) {
    %c0_i32 = arith.constant 0 : i32
    %c0_i32_0 = arith.constant 0 : i32
    return %arg0, %c0_i32 : i32, i32
  }
}

</mosaic_0001>

<llo_original>
// kernel: tpu_custom_call.1
$region0: #{tpu_custom_call.1}
  #allocation0 [shape = 'u32[]', space=smem, size = 0x4, offset = 0x4, fixed_abs, tag = 'smem constant byte address 0x4 - core index']
  #allocation1 [shape = 'u32[72,128]{1,0:T(1,128)}', space=vmem, size = 0x9000, scoped, tag = 'internal scratch']
  %s0 = inlined_call_operand.vmem [shape: f32[8,128], index: 0, kind: input, shape index: {}]
  %s1 = inlined_call_operand.vmem [shape: f32[128,128], index: 1, kind: input, shape index: {}]
  %s2 = inlined_call_operand.vmem [shape: f32[1,128], index: 2, kind: input, shape index: {}]
  %s3 = inlined_call_operand.hbm [shape: f32[128,128], index: 3, kind: input, shape index: {}]
  %s4 = inlined_call_operand.vmem [shape: f32[1,128], index: 4, kind: input, shape index: {}]
  %s5 = inlined_call_operand.vmem [shape: f32[128,8], index: 5, kind: input, shape index: {}]
  %s6 = inlined_call_operand.vmem [shape: f32[1,8], index: 6, kind: input, shape index: {}]
  %s7 = inlined_call_operand.hbm [shape: f32[8,8], index: 7, kind: output, shape index: {}]
  %s8 = sld [smem:[#allocation0]]
  $region42: #{tpu_custom_call.1} parent=0
    _
  %s10 = ssub.s32 1, %s8
  %s11 = scalar_select 0, %s10, %s8
  $region1: #{tpu_custom_call.1} parent=0
    #allocation2 [shape = 'u8[65536]{0}', space=vmem, size = 0x10000, scoped, tag = 'input window, operand 3, single buffered']
    #allocation3 [shape = 's32[1]{0}', space=sflag, size = 0x4, scoped, tag = 'scoped memory for tpu_custom_call.1']
    #allocation4 [shape = 's32[1]{0}', space=sflag, size = 0x4, scoped, tag = 'scoped memory for tpu_custom_call.1']
    #allocation5 [shape = 'u8[4096]{0}', space=vmem, size = 0x1000, scoped, tag = 'output window, operand 0, single buffered']
    %12 = vsyncpa [#allocation3], 0
    %13 = vsyncpa [#allocation4], 0
    // Predicated region
    $region2: #{tpu_custom_call.1} parent=1 // pred_check
      _
    $region3: #{tpu_custom_call.1} parent=1 // pred_check_branch
      %15 = sbr.rel (0) target = $region5
    $region4: #{tpu_custom_call.1} parent=1 // pred_region
      _
    $region5: #{tpu_custom_call.1} parent=1 // pred_fallthru
      _
    // Predicated region
    $region6: #{tpu_custom_call.1} parent=1 // pred_check
      _
    $region7: #{tpu_custom_call.1} parent=1 // pred_check_branch
      %17 = sbr.rel (0) target = $region9
    $region8: #{tpu_custom_call.1} parent=1 // pred_region
      _
    $region9: #{tpu_custom_call.1} parent=1 // pred_fallthru
      _
    // Predicated region
    $region10: #{tpu_custom_call.1} parent=1 // pred_check
      _
    $region11: #{tpu_custom_call.1} parent=1 // pred_check_branch
      %19 = sbr.rel (0) target = $region13
    $region12: #{tpu_custom_call.1} parent=1 // pred_region
      _
    $region13: #{tpu_custom_call.1} parent=1 // pred_fallthru
      _
    // Predicated region
    $region14: #{tpu_custom_call.1} parent=1 // pred_check
      _
    $region15: #{tpu_custom_call.1} parent=1 // pred_check_branch
      %21 = sbr.rel (0) target = $region17
    $region16: #{tpu_custom_call.1} parent=1 // pred_region
      %23 = vsyncadd [#allocation3], 0
      %s24 = sshll.u32 %s3, 4
      %s25 = int_to_ptr.hbm [resolvable:$true] %s24
      %s26 = sshll.u32 [#allocation2], 4
      %s27 = int_to_ptr.vmem [resolvable:$true] %s26
      %32 = dma.hbm_to_vmem [thread:$0]  %s25, 2048, %s27, [#allocation3], 128, 128, 8
    $region17: #{tpu_custom_call.1} parent=1 // pred_fallthru
      _
    // Predicated region
    $region18: #{tpu_custom_call.1} parent=1 // pred_check
      _
    $region19: #{tpu_custom_call.1} parent=1 // pred_check_branch
      %34 = sbr.rel (0) target = $region21
    $region20: #{tpu_custom_call.1} parent=1 // pred_region
      _
    $region21: #{tpu_custom_call.1} parent=1 // pred_fallthru
      _
    // Predicated region
    $region22: #{tpu_custom_call.1} parent=1 // pred_check
      _
    $region23: #{tpu_custom_call.1} parent=1 // pred_check_branch
      %36 = sbr.rel (0) target = $region25
    $region24: #{tpu_custom_call.1} parent=1 // pred_region
      _
    $region25: #{tpu_custom_call.1} parent=1 // pred_fallthru
      _
    // Predicated region
    $region26: #{tpu_custom_call.1} parent=1 // pred_check
      _
    $region27: #{tpu_custom_call.1} parent=1 // pred_check_branch
      %38 = sbr.rel (0) target = $region29
    $region28: #{tpu_custom_call.1} parent=1 // pred_region
      _
    $region29: #{tpu_custom_call.1} parent=1 // pred_fallthru
      _
    // Predicated region
    $region30: #{tpu_custom_call.1} parent=1 // pred_check
      _
    $region31: #{tpu_custom_call.1} parent=1 // pred_check_branch
      %40 = sbr.rel (0) target = $region33
    $region32: #{tpu_custom_call.1} parent=1 // pred_region
      %42 = dma.done [#allocation3], 2048
    $region33: #{tpu_custom_call.1} parent=1 // pred_fallthru
      _
    %v43 = vld [vmem:[%s0] sm:$0xff]
    %v44 = vld [vmem:[%s1] sm:$0xff]
    %v45 = vld [vmem:[%s1 + $0x8] sm:$0xff]
    %v46 = vld [vmem:[%s1 + $0x10] sm:$0xff]
    %v47 = vld [vmem:[%s1 + $0x18] sm:$0xff]
    %v48 = vld [vmem:[%s1 + $0x20] sm:$0xff]
    %v49 = vld [vmem:[%s1 + $0x28] sm:$0xff]
    %v50 = vld [vmem:[%s1 + $0x30] sm:$0xff]
    %v51 = vld [vmem:[%s1 + $0x38] sm:$0xff]
    %v52 = vld [vmem:[%s1 + $0x40] sm:$0xff]
    %v53 = vld [vmem:[%s1 + $0x48] sm:$0xff]
    %v54 = vld [vmem:[%s1 + $0x50] sm:$0xff]
    %v55 = vld [vmem:[%s1 + $0x58] sm:$0xff]
    %v56 = vld [vmem:[%s1 + $0x60] sm:$0xff]
    %v57 = vld [vmem:[%s1 + $0x68] sm:$0xff]
    %v58 = vld [vmem:[%s1 + $0x70] sm:$0xff]
    %v59 = vld [vmem:[%s1 + $0x78] sm:$0xff]
    %v60 = vld [vmem:[%s2] sm:$0x1]
    %v62 = vperm.slane %v60, 0
    %64 = vmatpush.msra.mxu0 %v59
    %65 = vmatpush.msra.mxu0 %v58
    %66 = vmatpush.msra.mxu0 %v57
    %67 = vmatpush.msra.mxu0 %v56
    %68 = vmatpush.msra.mxu0 %v55
    %69 = vmatpush.msra.mxu0 %v54
    %70 = vmatpush.msra.mxu0 %v53
    %71 = vmatpush.msra.mxu0 %v52
    %72 = vmatpush.msra.mxu0 %v51
    %73 = vmatpush.msra.mxu0 %v50
    %74 = vmatpush.msra.mxu0 %v49
    %75 = vmatpush.msra.mxu0 %v48
    %76 = vmatpush.msra.mxu0 %v47
    %77 = vmatpush.msra.mxu0 %v46
    %78 = vmatpush.msra.mxu0 %v45
    %79 = vmatpush.msra.mxu0 %v44
    %80 = vmatmul.f32.gmra.mxu0 %v43
    %v81 = vpop.f32.mrf.mxu0
    %v82 = vadd.f32 %v62, %v81
    %83 = vdwg.mxu0
    %v84 = vmax.f32 %v82, 0.0
    %v85 = vld [vmem:[#allocation2] sm:$0xff]
    %v86 = vld [vmem:[#allocation2 + $0x8] sm:$0xff]
    %v87 = vld [vmem:[#allocation2 + $0x10] sm:$0xff]
    %v88 = vld [vmem:[#allocation2 + $0x18] sm:$0xff]
    %v89 = vld [vmem:[#allocation2 + $0x20] sm:$0xff]
    %v90 = vld [vmem:[#allocation2 + $0x28] sm:$0xff]
    %v91 = vld [vmem:[#allocation2 + $0x30] sm:$0xff]
    %v92 = vld [vmem:[#allocation2 + $0x38] sm:$0xff]
    %v93 = vld [vmem:[#allocation2 + $0x40] sm:$0xff]
    %v94 = vld [vmem:[#allocation2 + $0x48] sm:$0xff]
    %v95 = vld [vmem:[#allocation2 + $0x50] sm:$0xff]
    %v96 = vld [vmem:[#allocation2 + $0x58] sm:$0xff]
    %v97 = vld [vmem:[#allocation2 + $0x60] sm:$0xff]
    %v98 = vld [vmem:[#allocation2 + $0x68] sm:$0xff]
    %v99 = vld [vmem:[#allocation2 + $0x70] sm:$0xff]
    %v100 = vld [vmem:[#allocation2 + $0x78] sm:$0xff]
    %v101 = vld [vmem:[%s4] sm:$0x1]
    %v103 = vperm.slane %v101, 0
    %105 = vmatpush.msra.mxu0 %v100
    %106 = vmatpush.msra.mxu0 %v99
    %107 = vmatpush.msra.mxu0 %v98
    %108 = vmatpush.msra.mxu0 %v97
    %109 = vmatpush.msra.mxu0 %v96
    %110 = vmatpush.msra.mxu0 %v95
    %111 = vmatpush.msra.mxu0 %v94
    %112 = vmatpush.msra.mxu0 %v93
    %113 = vmatpush.msra.mxu0 %v92
    %114 = vmatpush.msra.mxu0 %v91
    %115 = vmatpush.msra.mxu0 %v90
    %116 = vmatpush.msra.mxu0 %v89
    %117 = vmatpush.msra.mxu0 %v88
    %118 = vmatpush.msra.mxu0 %v87
    %119 = vmatpush.msra.mxu0 %v86
    %120 = vmatpush.msra.mxu0 %v85
    %121 = vmatmul.f32.gmra.mxu0 %v84
    %v122 = vpop.f32.mrf.mxu0
    %v123 = vadd.f32 %v103, %v122
    %124 = vdwg.mxu0
    %v125 = vmax.f32 %v123, 0.0
    %v126 = vld [vmem:[%s5] sm:$0xff]
    %v127 = vld [vmem:[%s5 + $0x8] sm:$0xff]
    %v128 = vld [vmem:[%s5 + $0x10] sm:$0xff]
    %v129 = vld [vmem:[%s5 + $0x18] sm:$0xff]
    %v130 = vld [vmem:[%s5 + $0x20] sm:$0xff]
    %v131 = vld [vmem:[%s5 + $0x28] sm:$0xff]
    %v132 = vld [vmem:[%s5 + $0x30] sm:$0xff]
    %v133 = vld [vmem:[%s5 + $0x38] sm:$0xff]
    %v134 = vld [vmem:[%s5 + $0x40] sm:$0xff]
    %v135 = vld [vmem:[%s5 + $0x48] sm:$0xff]
    %v136 = vld [vmem:[%s5 + $0x50] sm:$0xff]
    %v137 = vld [vmem:[%s5 + $0x58] sm:$0xff]
    %v138 = vld [vmem:[%s5 + $0x60] sm:$0xff]
    %v139 = vld [vmem:[%s5 + $0x68] sm:$0xff]
    %v140 = vld [vmem:[%s5 + $0x70] sm:$0xff]
    %v141 = vld [vmem:[%s5 + $0x78] sm:$0xff]
    %v142 = vld [vmem:[%s6] sm:$0x1]
    %v144 = vperm.slane %v142, 0
    %146 = vmatpush.msra.mxu0 %v141
    %147 = vmatpush.msra.mxu0 %v140
    %148 = vmatpush.msra.mxu0 %v139
    %149 = vmatpush.msra.mxu0 %v138
    %150 = vmatpush.msra.mxu0 %v137
    %151 = vmatpush.msra.mxu0 %v136
    %152 = vmatpush.msra.mxu0 %v135
    %153 = vmatpush.msra.mxu0 %v134
    %154 = vmatpush.msra.mxu0 %v133
    %155 = vmatpush.msra.mxu0 %v132
    %156 = vmatpush.msra.mxu0 %v131
    %157 = vmatpush.msra.mxu0 %v130
    %158 = vmatpush.msra.mxu0 %v129
    %159 = vmatpush.msra.mxu0 %v128
    %160 = vmatpush.msra.mxu0 %v127
    %161 = vmatpush.msra.mxu0 %v126
    %162 = vmatmul.f32.gmra.mxu0 %v125
    %v163 = vpop.f32.mrf.mxu0
    %v164 = vadd.f32 %v144, %v163
    %165 = vdwg.mxu0
    %v166 = vlaneseq
    %v167 = vand.u32 %v166, 127
    %vm168 = vcmp.lt.s32.totalorder %v167, 0
    %v169 = vsub.s32 0, %v167
    %v170 = vsel %vm168, %v169, %v167
    %v171 = vshrl.u32 %v170, 1
    %v172 = vand.u32 %v170, 1
    %v173 = vsub.s32 0, %v172
    %v174 = vsel %vm168, %v173, %v172
    %vm175 = vcmp.ne.s32.totalorder %v174, 0
    %vm176 = vcmp.lt.s32.totalorder %v174, 0
    %vm177 = vmand %vm176, %vm175
    %v178 = vadd.s32 %v174, 2
    %v179 = vsel %vm177, %v178, %v174
    %vm180 = vcmp.lt.s32.totalorder %v179, 1
    %v181 = vsel %vm180, 0.0, %v164
    %v182 = vmul.f32 %v181, 1.442695
    %v183 = vpow.pop %v182
    %v184 = vsel %vm180, %v164, %v183
    %vm185 = vcmask 64512
    %186 = vst.msk [vmem:[#allocation5] sm:$0xff] %vm185, %v184
    // Predicated region
    $region34: #{tpu_custom_call.1} parent=1 // pred_check
      _
    $region35: #{tpu_custom_call.1} parent=1 // pred_check_branch
      %188 = sbr.rel (0) target = $region37
    $region36: #{tpu_custom_call.1} parent=1 // pred_region
      %190 = vsyncadd [#allocation4], 0
      %s192 = sshll.u32 [#allocation5], 4
      %s193 = int_to_ptr.vmem [resolvable:$true] %s192
      %s194 = sshll.u32 %s7, 4
      %s195 = int_to_ptr.hbm [resolvable:$true] %s194
      %197 = dma.vmem_to_hbm [thread:$0]  %s193, 128, %s195, [#allocation4]
    $region37: #{tpu_custom_call.1} parent=1 // pred_fallthru
      _
    // Predicated region
    $region38: #{tpu_custom_call.1} parent=1 // pred_check
      _
    $region39: #{tpu_custom_call.1} parent=1 // pred_check_branch
      %199 = sbr.rel (0) target = $region41
    $region40: #{tpu_custom_call.1} parent=1 // pred_region
      %201 = dma.done [#allocation4], 128
    $region41: #{tpu_custom_call.1} parent=1 // pred_fallthru
      _
    %202 = vsyncpa [#allocation3], 1
    %203 = vsyncpa [#allocation4], 1

</llo_original>
